<compile_context>
chip_gen: v5e
topology: v5e:2x2
jax: 0.10.0
libtpu: 0.0.40
codegen_flags: <defaults>
</compile_context>

<pallas_src>
import jax
import jax.numpy as jnp
from jax.experimental import pallas as pl
from jax.experimental.pallas import tpu as pltpu


def _se_kernel(x_ref, w1t_ref, b1_ref, w2t_ref, b2_ref, out_ref):
    # x_ref:   (Nb, HW, C)   Nb batch elements, C on the lane axis
    # w1t_ref: (C, w_se)     fp32, pre-transposed first 1x1 conv weight
    # b1_ref:  (1, w_se)     fp32
    # w2t_ref: (w_se, C)     fp32, pre-transposed second 1x1 conv weight
    # b2_ref:  (1, C)        fp32
    # out_ref: (Nb, HW, C)

    # Squeeze: global average pool over the spatial (sublane) axis.
    # Upcast is fused into the reduce; no fp32 copy of the full tile is kept.
    s = jnp.mean(x_ref[...].astype(jnp.float32), axis=1)            # (Nb, C)

    # Excite 1 on the MXU: (Nb, C) @ (C, w_se) + bias, then Swish.
    h = jnp.dot(s, w1t_ref[...], preferred_element_type=jnp.float32)
    h = h + b1_ref[...]                                              # (Nb, w_se)
    h = h * jax.nn.sigmoid(h)

    # Excite 2 on the MXU: (Nb, w_se) @ (w_se, C) + bias, then sigmoid gate.
    g = jnp.dot(h, w2t_ref[...], preferred_element_type=jnp.float32)
    g = g + b2_ref[...]                                              # (Nb, C)
    g = jax.nn.sigmoid(g)

    # Scale: lane-dense broadcast of the per-(n, c) gate over the spatial
    # (sublane) axis, done in the input dtype (no fp32 tile temp).
    out_ref[...] = (x_ref[...] * g[:, None, :].astype(x_ref.dtype)).astype(
        out_ref.dtype)


def _vmem_capacity_bytes():
    """Best-effort query of physical VMEM; conservative (v7x) fallback."""
    try:
        info = pltpu.get_tpu_info()
        cap = getattr(info, "vmem_capacity_bytes", None)
        if cap:
            return int(cap)
    except Exception:
        pass
    return 64 * 1024 * 1024  # v7x per-TC VMEM


def _choose_nb(N, bytes_per_batch_elem, block_budget_bytes):
    """Largest divisor of N whose double-buffered in+out blocks fit the budget,
    while keeping >= 2 grid steps when N >= 2 (megacore / v7x 2-TC usage)."""
    per_nb = 4 * bytes_per_batch_elem            # in + out, double-buffered
    max_nb = max(1, block_budget_bytes // per_nb)
    if N >= 2:
        max_nb = min(max_nb, max(1, N // 2))     # keep >= 2 parallel steps
    nb = 1
    for d in range(1, N + 1):
        if N % d == 0 and d <= max_nb:
            nb = d
    return nb


def se_forward(x_nchw, w1, b1, w2, b2):
    """SE block forward.
    x_nchw: (N, C, H, W); w1: (w_se, C); b1: (w_se,); w2: (C, w_se); b2: (C,)."""
    N, C, H, W = x_nchw.shape
    w_se = w1.shape[0]
    HW = H * W
    itemsize = jnp.dtype(x_nchw.dtype).itemsize

    # NHWC-ish layout: (N, HW, C) with C on the lane axis.
    # TODO(synk): in a real NHWC network this transpose would not be needed.
    x = jnp.transpose(x_nchw, (0, 2, 3, 1)).reshape(N, HW, C)

    # fp32, pre-transposed weights / biases (cast once in the wrapper, not per
    # grid step inside the kernel).
    w1t = jnp.asarray(w1, jnp.float32).T            # (C, w_se)
    w2t = jnp.asarray(w2, jnp.float32).T            # (w_se, C)
    b1_2d = jnp.asarray(b1, jnp.float32).reshape(1, w_se)
    b2_2d = jnp.asarray(b2, jnp.float32).reshape(1, C)

    # VMEM budgeting: explicit limit below physical capacity, block size from
    # the remaining budget for the double-buffered in/out tiles.
    vmem_cap = _vmem_capacity_bytes()
    vmem_limit = int(vmem_cap * 3 // 4)
    block_budget = int(vmem_limit * 4 // 5)
    nb = _choose_nb(N, HW * C * itemsize, block_budget)
    grid = (N // nb,)

    weight_bytes = (w1t.size + w2t.size + b1_2d.size + b2_2d.size) * 4
    cost = pl.CostEstimate(
        flops=int(N * (2 * C * w_se * 2 + 2 * C * HW)),
        transcendentals=int(N * (w_se + C)),
        bytes_accessed=int(2 * N * C * HW * itemsize + weight_bytes),
    )

    out = pl.pallas_call(
        _se_kernel,
        out_shape=jax.ShapeDtypeStruct((N, HW, C), x_nchw.dtype),
        grid_spec=pltpu.PrefetchScalarGridSpec(
            num_scalar_prefetch=0,
            grid=grid,
            in_specs=[
                pl.BlockSpec((nb, HW, C), lambda n: (n, 0, 0)),
                pl.BlockSpec((C, w_se), lambda n: (0, 0)),
                pl.BlockSpec((1, w_se), lambda n: (0, 0)),
                pl.BlockSpec((w_se, C), lambda n: (0, 0)),
                pl.BlockSpec((1, C), lambda n: (0, 0)),
            ],
            out_specs=pl.BlockSpec((nb, HW, C), lambda n: (n, 0, 0)),
        ),
        compiler_params=pltpu.CompilerParams(
            dimension_semantics=("parallel",),
            vmem_limit_bytes=vmem_limit,
        ),
        cost_estimate=cost,
    )(x, w1t, b1_2d, w2t, b2_2d)

    # Back to NCHW.
    return jnp.transpose(out.reshape(N, H, W, C), (0, 3, 1, 2))


def se_reference(x_nchw, w1, b1, w2, b2):
    """Pure-JAX reference mirroring the PyTorch module."""
    s = jnp.mean(x_nchw.astype(jnp.float32), axis=(2, 3))    # (N, C)
    h = s @ w1.T.astype(jnp.float32) + b1                    # (N, w_se)
    h = h * jax.nn.sigmoid(h)                                # Swish
    g = h @ w2.T.astype(jnp.float32) + b2                    # (N, C)
    g = jax.nn.sigmoid(g)
    return (x_nchw * g[:, :, None, None].astype(x_nchw.dtype)).astype(
        x_nchw.dtype)


if __name__ == "__main__":
    key = jax.random.PRNGKey(0)
    N, C, H, W = 2, 4, 16, 16
    w_se = 2

    kx, k1, kb1, k2, kb2 = jax.random.split(key, 5)
    x = jax.random.normal(kx, (N, C, H, W), dtype=jnp.float32)
    # 1x1 conv weights (kernel-size dims squeezed away): (out_ch, in_ch)
    w1 = jax.random.normal(k1, (w_se, C), dtype=jnp.float32) * 0.5
    b1 = jax.random.normal(kb1, (w_se,), dtype=jnp.float32) * 0.1
    w2 = jax.random.normal(k2, (C, w_se), dtype=jnp.float32) * 0.5
    b2 = jax.random.normal(kb2, (C,), dtype=jnp.float32) * 0.1

    out = se_forward(x, w1, b1, w2, b2)
    jax.block_until_ready(out)

    ref = se_reference(x, w1, b1, w2, b2)
    assert out.shape == x.shape and out.dtype == x.dtype
    assert jnp.allclose(out, ref, atol=1e-5, rtol=1e-5)

    print("KERNEL_OK")
</pallas_src>

<mosaic_0001>
module attributes {stable_mosaic.version = 11 : i64} {
  func.func @_se_kernel(%arg0: i32, %arg1: memref<1x256x4xf32, #tpu.memory_space<vmem>>, %arg2: memref<4x2xf32, #tpu.memory_space<vmem>>, %arg3: memref<1x2xf32, #tpu.memory_space<vmem>>, %arg4: memref<2x4xf32, #tpu.memory_space<vmem>>, %arg5: memref<1x4xf32, #tpu.memory_space<vmem>>, %arg6: memref<1x256x4xf32, #tpu.memory_space<vmem>>) attributes {dimension_semantics = [#tpu.dimension_semantics<parallel>], iteration_bounds = array<i64: 2>, scalar_prefetch = 0 : i64, scratch_operands = 0 : i64, tpu.core_type = #tpu.core_type<tc>, window_params = [{transform_indices = @transform_0, window_bounds = array<i64: 1, 256, 4>}, {pipeline_mode = #tpu.pipeline_mode<synchronous>, transform_indices = @transform_1, window_bounds = array<i64: 4, 2>}, {pipeline_mode = #tpu.pipeline_mode<synchronous>, transform_indices = @transform_2, window_bounds = array<i64: 1, 2>}, {pipeline_mode = #tpu.pipeline_mode<synchronous>, transform_indices = @transform_3, window_bounds = array<i64: 2, 4>}, {pipeline_mode = #tpu.pipeline_mode<synchronous>, transform_indices = @transform_4, window_bounds = array<i64: 1, 4>}, {transform_indices = @transform_5, window_bounds = array<i64: 1, 256, 4>}]} {
    %c0 = arith.constant 0 : index
    %c0_0 = arith.constant 0 : index
    %c0_1 = arith.constant 0 : index
    %0 = vector.load %arg1[%c0, %c0_0, %c0_1] : memref<1x256x4xf32, #tpu.memory_space<vmem>>, vector<1x256x4xf32>
    %cst = arith.constant dense<0.000000e+00> : vector<1x4xf32>
    %1 = vector.multi_reduction <add>, %0, %cst [1] : vector<1x256x4xf32> to vector<1x4xf32>
    %cst_2 = arith.constant 2.560000e+02 : f32
    %2 = vector.broadcast %cst_2 : f32 to vector<1x4xf32>
    %3 = arith.divf %1, %2 : vector<1x4xf32>
    %c0_3 = arith.constant 0 : index
    %c0_4 = arith.constant 0 : index
    %4 = vector.load %arg2[%c0_3, %c0_4] : memref<4x2xf32, #tpu.memory_space<vmem>>, vector<4x2xf32>
    %cst_5 = arith.constant dense<0.000000e+00> : vector<1x2xf32>
    %5 = tpu.matmul %3, %4, %cst_5 {dimension_numbers = #tpu.dot_dimension_numbers<[1], [0], [0], [1], [0, 0, 1, 1], [], []>} : vector<1x4xf32>, vector<4x2xf32>, vector<1x2xf32> -> vector<1x2xf32>
    %c0_6 = arith.constant 0 : index
    %c0_7 = arith.constant 0 : index
    %6 = vector.load %arg3[%c0_6, %c0_7] : memref<1x2xf32, #tpu.memory_space<vmem>>, vector<1x2xf32>
    %7 = arith.addf %5, %6 : vector<1x2xf32>
    %8 = arith.negf %7 : vector<1x2xf32>
    %9 = math.exp %8 : vector<1x2xf32>
    %cst_8 = arith.constant 1.000000e+00 : f32
    %10 = vector.broadcast %cst_8 : f32 to vector<1x2xf32>
    %11 = arith.addf %10, %9 : vector<1x2xf32>
    %12 = arith.divf %10, %11 : vector<1x2xf32>
    %13 = arith.mulf %7, %12 : vector<1x2xf32>
    %c0_9 = arith.constant 0 : index
    %c0_10 = arith.constant 0 : index
    %14 = vector.load %arg4[%c0_9, %c0_10] : memref<2x4xf32, #tpu.memory_space<vmem>>, vector<2x4xf32>
    %cst_11 = arith.constant dense<0.000000e+00> : vector<1x4xf32>
    %15 = tpu.matmul %13, %14, %cst_11 {dimension_numbers = #tpu.dot_dimension_numbers<[1], [0], [0], [1], [0, 0, 1, 1], [], []>} : vector<1x2xf32>, vector<2x4xf32>, vector<1x4xf32> -> vector<1x4xf32>
    %c0_12 = arith.constant 0 : index
    %c0_13 = arith.constant 0 : index
    %16 = vector.load %arg5[%c0_12, %c0_13] : memref<1x4xf32, #tpu.memory_space<vmem>>, vector<1x4xf32>
    %17 = arith.addf %15, %16 : vector<1x4xf32>
    %18 = arith.negf %17 : vector<1x4xf32>
    %19 = math.exp %18 : vector<1x4xf32>
    %cst_14 = arith.constant 1.000000e+00 : f32
    %20 = vector.broadcast %cst_14 : f32 to vector<1x4xf32>
    %21 = arith.addf %20, %19 : vector<1x4xf32>
    %22 = arith.divf %20, %21 : vector<1x4xf32>
    %c0_15 = arith.constant 0 : index
    %c0_16 = arith.constant 0 : index
    %c0_17 = arith.constant 0 : index
    %23 = vector.load %arg1[%c0_15, %c0_16, %c0_17] : memref<1x256x4xf32, #tpu.memory_space<vmem>>, vector<1x256x4xf32>
    %24 = vector.shape_cast %22 : vector<1x4xf32> to vector<1x1x4xf32>
    %25 = vector.broadcast %24 : vector<1x1x4xf32> to vector<1x256x4xf32>
    %26 = arith.mulf %23, %25 : vector<1x256x4xf32>
    %c0_18 = arith.constant 0 : index
    %c0_19 = arith.constant 0 : index
    %c0_20 = arith.constant 0 : index
    %27 = vector.load %arg6[%c0_18, %c0_19, %c0_20] : memref<1x256x4xf32, #tpu.memory_space<vmem>>, vector<1x256x4xf32>
    tpu.vector_store %arg6[%c0_18, %c0_19, %c0_20], %26 {strides = array<i32>} : memref<1x256x4xf32, #tpu.memory_space<vmem>>, vector<1x256x4xf32>,
    return
  }
  func.func @transform_0(%arg0: i32) -> (i32, i32, i32) {
    %c0_i32 = arith.constant 0 : i32
    %c0_i32_0 = arith.constant 0 : i32
    %c0_i32_1 = arith.constant 0 : i32
    return %arg0, %c0_i32, %c0_i32_0 : i32, i32, i32
  }
  func.func @transform_1(%arg0: i32) -> (i32, i32) {
    %c0_i32 = arith.constant 0 : i32
    %c0_i32_0 = arith.constant 0 : i32
    %c0_i32_1 = arith.constant 0 : i32
    return %c0_i32, %c0_i32_0 : i32, i32
  }
  func.func @transform_2(%arg0: i32) -> (i32, i32) {
    %c0_i32 = arith.constant 0 : i32
    %c0_i32_0 = arith.constant 0 : i32
    %c0_i32_1 = arith.constant 0 : i32
    return %c0_i32, %c0_i32_0 : i32, i32
  }
  func.func @transform_3(%arg0: i32) -> (i32, i32) {
    %c0_i32 = arith.constant 0 : i32
    %c0_i32_0 = arith.constant 0 : i32
    %c0_i32_1 = arith.constant 0 : i32
    return %c0_i32, %c0_i32_0 : i32, i32
  }
  func.func @transform_4(%arg0: i32) -> (i32, i32) {
    %c0_i32 = arith.constant 0 : i32
    %c0_i32_0 = arith.constant 0 : i32
    %c0_i32_1 = arith.constant 0 : i32
    return %c0_i32, %c0_i32_0 : i32, i32
  }
  func.func @transform_5(%arg0: i32) -> (i32, i32, i32) {
    %c0_i32 = arith.constant 0 : i32
    %c0_i32_0 = arith.constant 0 : i32
    %c0_i32_1 = arith.constant 0 : i32
    return %arg0, %c0_i32, %c0_i32_0 : i32, i32, i32
  }
}

</mosaic_0001>

<llo_original>
// kernel: tpu_custom_call.1
$region0: #{tpu_custom_call.1}
  #allocation0 [shape = 'u32[]', space=smem, size = 0x4, offset = 0x4, fixed_abs, tag = 'smem constant byte address 0x4 - core index']
  #allocation1 [shape = 'u32[72,128]{1,0:T(1,128)}', space=vmem, size = 0x9000, scoped, tag = 'internal scratch']
  %s0 = inlined_call_operand.vmem [shape: f32[2,256,4], index: 0, kind: input, shape index: {}]
  %s1 = inlined_call_operand.vmem [shape: f32[4,2], index: 1, kind: input, shape index: {}]
  %s2 = inlined_call_operand.vmem [shape: f32[1,2], index: 2, kind: input, shape index: {}]
  %s3 = inlined_call_operand.vmem [shape: f32[2,4], index: 3, kind: input, shape index: {}]
  %s4 = inlined_call_operand.vmem [shape: f32[1,4], index: 4, kind: input, shape index: {}]
  %s5 = inlined_call_operand.vmem [shape: f32[2,256,4], index: 5, kind: output, shape index: {}]
  %s6 = sld [smem:[#allocation0]]
  $region53: #{tpu_custom_call.1} parent=0
    _
  %s8 = ssub.s32 1, %s6
  %s9 = scalar_select 0, %s8, %s6
  loop: start=0, step=1, limit=4
  $region2: #{tpu_custom_call.1} parent=0 // loop_pre_header
    _
  $region3: #{tpu_custom_call.1} parent=0 // loop_header
    %s11 = sphi 0, %s15
    %p12 = scmp.ge.s32.totalorder %s11, 4
    %s21 = sphi 0, %s23
    %s24 = sphi 0, %s21
    %s25 = sphi 0, %s24
    %s41 = sphi 0, %s25
    %s45 = sphi 0, %s45
    %s47 = sphi 0, %s45
    %s48 = sphi 0, %s47
    %s62 = sphi 0, %s48
    %s66 = sphi 0, %s66
    %s68 = sphi 0, %s66
    %s69 = sphi 0, %s68
    %s83 = sphi 0, %s69
    %s87 = sphi 0, %s87
    %s89 = sphi 0, %s87
    %s90 = sphi 0, %s89
    %s104 = sphi 0, %s90
    %s108 = sphi 0, %s108
    %s110 = sphi 0, %s108
    %s111 = sphi 0, %s110
    %s125 = sphi 0, %s111
    %s131 = sphi 0, %s133
    %s134 = sphi 0, %s131
    %s135 = sphi 0, %s134
    %s151 = sphi 0, %s135
  $region4: #{tpu_custom_call.1} parent=0 // loop_header_branch
    %14 = sbr.rel (%p12) target = $region8
  $region5: #{tpu_custom_call.1} parent=0 // loop_body
    %s16 = ssub.s32 %s11, 1
    %s17 = ssub.s32 %s11, 2
    %s18 = sadd.s32 %s11, 1
    %s19 = ssub.s32 %s11, %s18
    %p20 = scmp.eq.s32.totalorder %s19, 0
    %s22 = sadd.s32 %s21, 1
    %s23 = scalar_select %p20, %s21, %s22
    %p26 = pneg %p20
    %p27 = scmp.eq.s32.totalorder %s11, 1
    %p28 = por %p26, %p27
    %p29 = scmp.ne.s32.totalorder %s21, %s24
    %p30 = scmp.eq.s32.totalorder %s11, 0
    %p31 = por %p29, %p30
    %p32 = scmp.ne.s32.totalorder %s21, %s24
    %p33 = scmp.eq.s32.totalorder %s16, 1
    %p34 = por %p32, %p33
    %p35 = scmp.ne.s32.totalorder %s24, %s25
    %p36 = scmp.eq.s32.totalorder %s16, 0
    %p37 = por %p35, %p36
    %p38 = scmp.ne.s32.totalorder %s24, %s25
    %p39 = scmp.eq.s32.totalorder %s17, 1
    %p40 = por %p38, %p39
    %p42 = scmp.ne.s32.totalorder %s25, %s41
    %p43 = scmp.eq.s32.totalorder %s17, 0
    %p44 = por %p42, %p43
    %s46 = sadd.s32 %s45, 1
    %p49 = scmp.eq.s32.totalorder %s11, 1
    %p50 = scmp.ne.s32.totalorder %s45, %s47
    %p51 = scmp.eq.s32.totalorder %s11, 0
    %p52 = por %p50, %p51
    %p53 = scmp.ne.s32.totalorder %s45, %s47
    %p54 = scmp.eq.s32.totalorder %s16, 1
    %p55 = por %p53, %p54
    %p56 = scmp.ne.s32.totalorder %s47, %s48
    %p57 = scmp.eq.s32.totalorder %s16, 0
    %p58 = por %p56, %p57
    %p59 = scmp.ne.s32.totalorder %s47, %s48
    %p60 = scmp.eq.s32.totalorder %s17, 1
    %p61 = por %p59, %p60
    %p63 = scmp.ne.s32.totalorder %s48, %s62
    %p64 = scmp.eq.s32.totalorder %s17, 0
    %p65 = por %p63, %p64
    %s67 = sadd.s32 %s66, 1
    %p70 = scmp.eq.s32.totalorder %s11, 1
    %p71 = scmp.ne.s32.totalorder %s66, %s68
    %p72 = scmp.eq.s32.totalorder %s11, 0
    %p73 = por %p71, %p72
    %p74 = scmp.ne.s32.totalorder %s66, %s68
    %p75 = scmp.eq.s32.totalorder %s16, 1
    %p76 = por %p74, %p75
    %p77 = scmp.ne.s32.totalorder %s68, %s69
    %p78 = scmp.eq.s32.totalorder %s16, 0
    %p79 = por %p77, %p78
    %p80 = scmp.ne.s32.totalorder %s68, %s69
    %p81 = scmp.eq.s32.totalorder %s17, 1
    %p82 = por %p80, %p81
    %p84 = scmp.ne.s32.totalorder %s69, %s83
    %p85 = scmp.eq.s32.totalorder %s17, 0
    %p86 = por %p84, %p85
    %s88 = sadd.s32 %s87, 1
    %p91 = scmp.eq.s32.totalorder %s11, 1
    %p92 = scmp.ne.s32.totalorder %s87, %s89
    %p93 = scmp.eq.s32.totalorder %s11, 0
    %p94 = por %p92, %p93
    %p95 = scmp.ne.s32.totalorder %s87, %s89
    %p96 = scmp.eq.s32.totalorder %s16, 1
    %p97 = por %p95, %p96
    %p98 = scmp.ne.s32.totalorder %s89, %s90
    %p99 = scmp.eq.s32.totalorder %s16, 0
    %p100 = por %p98, %p99
    %p101 = scmp.ne.s32.totalorder %s89, %s90
    %p102 = scmp.eq.s32.totalorder %s17, 1
    %p103 = por %p101, %p102
    %p105 = scmp.ne.s32.totalorder %s90, %s104
    %p106 = scmp.eq.s32.totalorder %s17, 0
    %p107 = por %p105, %p106
    %s109 = sadd.s32 %s108, 1
    %p112 = scmp.eq.s32.totalorder %s11, 1
    %p113 = scmp.ne.s32.totalorder %s108, %s110
    %p114 = scmp.eq.s32.totalorder %s11, 0
    %p115 = por %p113, %p114
    %p116 = scmp.ne.s32.totalorder %s108, %s110
    %p117 = scmp.eq.s32.totalorder %s16, 1
    %p118 = por %p116, %p117
    %p119 = scmp.ne.s32.totalorder %s110, %s111
    %p120 = scmp.eq.s32.totalorder %s16, 0
    %p121 = por %p119, %p120
    %p122 = scmp.ne.s32.totalorder %s110, %s111
    %p123 = scmp.eq.s32.totalorder %s17, 1
    %p124 = por %p122, %p123
    %p126 = scmp.ne.s32.totalorder %s111, %s125
    %p127 = scmp.eq.s32.totalorder %s17, 0
    %p128 = por %p126, %p127
    %s129 = ssub.s32 %s11, %s18
    %p130 = scmp.eq.s32.totalorder %s129, 0
    %s132 = sadd.s32 %s131, 1
    %s133 = scalar_select %p130, %s131, %s132
    %p136 = pneg %p130
    %p137 = scmp.eq.s32.totalorder %s11, 1
    %p138 = por %p136, %p137
    %p139 = scmp.ne.s32.totalorder %s131, %s134
    %p140 = scmp.eq.s32.totalorder %s11, 0
    %p141 = por %p139, %p140
    %p142 = scmp.ne.s32.totalorder %s131, %s134
    %p143 = scmp.eq.s32.totalorder %s16, 1
    %p144 = por %p142, %p143
    %p145 = scmp.ne.s32.totalorder %s134, %s135
    %p146 = scmp.eq.s32.totalorder %s16, 0
    %p147 = por %p145, %p146
    %p148 = scmp.ne.s32.totalorder %s134, %s135
    %p149 = scmp.eq.s32.totalorder %s17, 1
    %p150 = por %p148, %p149
    %p152 = scmp.ne.s32.totalorder %s135, %s151
    %p153 = scmp.eq.s32.totalorder %s17, 0
    %p154 = por %p152, %p153
    %p155 = scmp.le.s32.totalorder 1, %s11
    %p156 = scmp.lt.s32.totalorder %s11, 3
    %p157 = pnand %p155, %p156
    %p158 = pneg %p157
    // Predicated region
    $region9: #{tpu_custom_call.1} parent=5 // pred_check
      _
    $region10: #{tpu_custom_call.1} parent=5 // pred_check_branch
      %160 = sbr.rel (%p157) target = $region12
    $region11: #{tpu_custom_call.1} parent=5 // pred_region
      %s161 = ssub.s32 %s11, 1
      // Predicated region
      $region13: #{tpu_custom_call.1} parent=11 // pred_check
        %p162 = pneg %p58
      $region14: #{tpu_custom_call.1} parent=11 // pred_check_branch
        %164 = sbr.rel (%p162) target = $region16
      $region15: #{tpu_custom_call.1} parent=11 // pred_region
        _
      $region16: #{tpu_custom_call.1} parent=11 // pred_fallthru
        _
      // Predicated region
      $region17: #{tpu_custom_call.1} parent=11 // pred_check
        %p165 = pneg %p79
      $region18: #{tpu_custom_call.1} parent=11 // pred_check_branch
        %167 = sbr.rel (%p165) target = $region20
      $region19: #{tpu_custom_call.1} parent=11 // pred_region
        _
      $region20: #{tpu_custom_call.1} parent=11 // pred_fallthru
        _
      // Predicated region
      $region21: #{tpu_custom_call.1} parent=11 // pred_check
        %p168 = pneg %p100
      $region22: #{tpu_custom_call.1} parent=11 // pred_check_branch
        %170 = sbr.rel (%p168) target = $region24
      $region23: #{tpu_custom_call.1} parent=11 // pred_region
        _
      $region24: #{tpu_custom_call.1} parent=11 // pred_fallthru
        _
      // Predicated region
      $region25: #{tpu_custom_call.1} parent=11 // pred_check
        %p171 = pneg %p121
      $region26: #{tpu_custom_call.1} parent=11 // pred_check_branch
        %173 = sbr.rel (%p171) target = $region28
      $region27: #{tpu_custom_call.1} parent=11 // pred_region
        _
      $region28: #{tpu_custom_call.1} parent=11 // pred_fallthru
        _
    $region12: #{tpu_custom_call.1} parent=5 // pred_fallthru
      _
    %p174 = scmp.lt.s32.totalorder %s11, 2
    // Predicated region
    $region29: #{tpu_custom_call.1} parent=5 // pred_check
      %p175 = pneg %p174
    $region30: #{tpu_custom_call.1} parent=5 // pred_check_branch
      %177 = sbr.rel (%p175) target = $region32
    $region31: #{tpu_custom_call.1} parent=5 // pred_region
      // Predicated region
      $region33: #{tpu_custom_call.1} parent=31 // pred_check
        %p178 = pneg %p31
      $region34: #{tpu_custom_call.1} parent=31 // pred_check_branch
        %180 = sbr.rel (%p178) target = $region36
      $region35: #{tpu_custom_call.1} parent=31 // pred_region
        %p181 = scmp.lt.s32.totalorder %s11, 1
        %s182 = scalar_select %p181, %s11, 1
        %s183 = smul.addr %s182, 32
        %s184 = smul.addr %s183, 8
        %s185 = scalar_lea.vmem %s0, %s184
      $region36: #{tpu_custom_call.1} parent=31 // pred_fallthru
        _
    $region32: #{tpu_custom_call.1} parent=5 // pred_fallthru
      _
    %p186 = scmp.le.s32.totalorder 1, %s11
    %p187 = scmp.lt.s32.totalorder %s11, 3
    %p188 = pnand %p186, %p187
    %p189 = pneg %p188
    // Predicated region
    $region37: #{tpu_custom_call.1} parent=5 // pred_check
      _
    $region38: #{tpu_custom_call.1} parent=5 // pred_check_branch
      %191 = sbr.rel (%p188) target = $region40
    $region39: #{tpu_custom_call.1} parent=5 // pred_region
      %s192 = ssub.s32 %s11, 1
      %p193 = scmp.lt.s32.totalorder %s16, 1
      %s194 = scalar_select %p193, %s16, 1
      %s195 = smul.addr %s194, 32
      %s196 = smul.addr %s195, 8
      %s197 = scalar_lea.vmem %s0, %s196
      %p198 = pneg %p37
      %p199 = pneg %p34
      %p200 = pneg %p58
      %p201 = pneg %p55
      %p202 = pneg %p79
      %p203 = pneg %p76
      %p204 = pneg %p100
      %p205 = pneg %p97
      %p206 = pneg %p121
      %p207 = pneg %p118
      %p208 = pneg %p147
      %p209 = pneg %p144
      %p210 = scmp.lt.s32.totalorder %s16, 1
      %s211 = scalar_select %p210, %s16, 1
      %s212 = smul.addr %s211, 32
      %s213 = smul.addr %s212, 8
      %s214 = scalar_lea.vmem %s5, %s213
      %p215 = scmp.lt.s32.totalorder %s16, 1
      %s216 = scalar_select %p215, %s16, 1
      %s217 = smul.addr %s216, 32
      %s218 = smul.addr %s217, 8
      %s219 = scalar_lea.vmem %s0, %s218
      %p220 = scmp.lt.s32.totalorder %s16, 1
      %s221 = scalar_select %p220, %s16, 1
      %s222 = smul.addr %s221, 32
      %s223 = smul.addr %s222, 8
      %s224 = scalar_lea.vmem %s5, %s223
      %v225 = vld [vmem:[%s219] sm:$0xff]
      %v226 = vld [vmem:[%s219 + $0x8] sm:$0xff]
      %v227 = vld [vmem:[%s219 + $0x10] sm:$0xff]
      %v228 = vld [vmem:[%s219 + $0x18] sm:$0xff]
      %v229 = vld [vmem:[%s219 + $0x20] sm:$0xff]
      %v230 = vld [vmem:[%s219 + $0x28] sm:$0xff]
      %v231 = vld [vmem:[%s219 + $0x30] sm:$0xff]
      %v232 = vld [vmem:[%s219 + $0x38] sm:$0xff]
      %v233 = vld [vmem:[%s219 + $0x40] sm:$0xff]
      %v234 = vld [vmem:[%s219 + $0x48] sm:$0xff]
      %v235 = vld [vmem:[%s219 + $0x50] sm:$0xff]
      %v236 = vld [vmem:[%s219 + $0x58] sm:$0xff]
      %v237 = vld [vmem:[%s219 + $0x60] sm:$0xff]
      %v238 = vld [vmem:[%s219 + $0x68] sm:$0xff]
      %v239 = vld [vmem:[%s219 + $0x70] sm:$0xff]
      %v240 = vld [vmem:[%s219 + $0x78] sm:$0xff]
      %v241 = vld [vmem:[%s219 + $0x80] sm:$0xff]
      %v242 = vld [vmem:[%s219 + $0x88] sm:$0xff]
      %v243 = vld [vmem:[%s219 + $0x90] sm:$0xff]
      %v244 = vld [vmem:[%s219 + $0x98] sm:$0xff]
      %v245 = vld [vmem:[%s219 + $0xa0] sm:$0xff]
      %v246 = vld [vmem:[%s219 + $0xa8] sm:$0xff]
      %v247 = vld [vmem:[%s219 + $0xb0] sm:$0xff]
      %v248 = vld [vmem:[%s219 + $0xb8] sm:$0xff]
      %v249 = vld [vmem:[%s219 + $0xc0] sm:$0xff]
      %v250 = vld [vmem:[%s219 + $0xc8] sm:$0xff]
      %v251 = vld [vmem:[%s219 + $0xd0] sm:$0xff]
      %v252 = vld [vmem:[%s219 + $0xd8] sm:$0xff]
      %v253 = vld [vmem:[%s219 + $0xe0] sm:$0xff]
      %v254 = vld [vmem:[%s219 + $0xe8] sm:$0xff]
      %v255 = vld [vmem:[%s219 + $0xf0] sm:$0xff]
      %v256 = vld [vmem:[%s219 + $0xf8] sm:$0xff]
      %vm257 = vcmask 31744
      %v258 = vsel %vm257, %v225, 0.0
      %v259 = vsel %vm257, %v226, 0.0
      %v260 = vadd.f32 %v258, %v259
      %v261 = vsel %vm257, %v227, 0.0
      %v262 = vadd.f32 %v260, %v261
      %v263 = vsel %vm257, %v228, 0.0
      %v264 = vadd.f32 %v262, %v263
      %v265 = vsel %vm257, %v229, 0.0
      %v266 = vadd.f32 %v264, %v265
      %v267 = vsel %vm257, %v230, 0.0
      %v268 = vadd.f32 %v266, %v267
      %v269 = vsel %vm257, %v231, 0.0
      %v270 = vadd.f32 %v268, %v269
      %v271 = vsel %vm257, %v232, 0.0
      %v272 = vadd.f32 %v270, %v271
      %v273 = vsel %vm257, %v233, 0.0
      %v274 = vadd.f32 %v272, %v273
      %v275 = vsel %vm257, %v234, 0.0
      %v276 = vadd.f32 %v274, %v275
      %v277 = vsel %vm257, %v235, 0.0
      %v278 = vadd.f32 %v276, %v277
      %v279 = vsel %vm257, %v236, 0.0
      %v280 = vadd.f32 %v278, %v279
      %v281 = vsel %vm257, %v237, 0.0
      %v282 = vadd.f32 %v280, %v281
      %v283 = vsel %vm257, %v238, 0.0
      %v284 = vadd.f32 %v282, %v283
      %v285 = vsel %vm257, %v239, 0.0
      %v286 = vadd.f32 %v284, %v285
      %v287 = vsel %vm257, %v240, 0.0
      %v288 = vadd.f32 %v286, %v287
      %v289 = vsel %vm257, %v241, 0.0
      %v290 = vadd.f32 %v288, %v289
      %v291 = vsel %vm257, %v242, 0.0
      %v292 = vadd.f32 %v290, %v291
      %v293 = vsel %vm257, %v243, 0.0
      %v294 = vadd.f32 %v292, %v293
      %v295 = vsel %vm257, %v244, 0.0
      %v296 = vadd.f32 %v294, %v295
      %v297 = vsel %vm257, %v245, 0.0
      %v298 = vadd.f32 %v296, %v297
      %v299 = vsel %vm257, %v246, 0.0
      %v300 = vadd.f32 %v298, %v299
      %v301 = vsel %vm257, %v247, 0.0
      %v302 = vadd.f32 %v300, %v301
      %v303 = vsel %vm257, %v248, 0.0
      %v304 = vadd.f32 %v302, %v303
      %v305 = vsel %vm257, %v249, 0.0
      %v306 = vadd.f32 %v304, %v305
      %v307 = vsel %vm257, %v250, 0.0
      %v308 = vadd.f32 %v306, %v307
      %v309 = vsel %vm257, %v251, 0.0
      %v310 = vadd.f32 %v308, %v309
      %v311 = vsel %vm257, %v252, 0.0
      %v312 = vadd.f32 %v310, %v311
      %v313 = vsel %vm257, %v253, 0.0
      %v314 = vadd.f32 %v312, %v313
      %v315 = vsel %vm257, %v254, 0.0
      %v316 = vadd.f32 %v314, %v315
      %v317 = vsel %vm257, %v255, 0.0
      %v318 = vadd.f32 %v316, %v317
      %v319 = vsel %vm257, %v256, 0.0
      %v320 = vadd.f32 %v318, %v319
      %v321 = vrot.slane %v320, 4
      %v322 = vadd.f32 %v320, %v321
      %v323 = vrot.slane %v322, 2
      %v324 = vadd.f32 %v322, %v323
      %v325 = vrot.slane %v324, 1
      %v326 = vadd.f32 %v324, %v325
      %v327 = vrcp.pop 256.0
      %v328 = vmul.f32 256.0, %v327
      %v329 = vsub.f32 1.0, %v328
      %v330 = vmul.f32 %v327, %v329
      %v331 = vadd.f32 %v327, %v330
      %vm332 = vweird.f32 %v327
      %v333 = vsel %vm332, %v327, %v331
      %v334 = vmul.f32 %v326, %v333
      %v335 = vld [vmem:[%s1] sm:$0xf]
      %v336 = vld [vmem:[%s2] sm:$0x1]
      %v338 = vsel %vm257, %v334, 0
      %vm340 = vcmask 1043456
      %v342 = vsel %vm340, %v335, 0
      %344 = vmatpush.msra.mxu0 0.0
      %345 = vmatpush.msra.mxu0 0.0
      %346 = vmatpush.msra.mxu0 0.0
      %347 = vmatpush.msra.mxu0 0.0
      %348 = vmatpush.msra.mxu0 0.0
      %349 = vmatpush.msra.mxu0 0.0
      %350 = vmatpush.msra.mxu0 0.0
      %351 = vmatpush.msra.mxu0 0.0
      %352 = vmatpush.msra.mxu0 0.0
      %353 = vmatpush.msra.mxu0 0.0
      %354 = vmatpush.msra.mxu0 0.0
      %355 = vmatpush.msra.mxu0 0.0
      %356 = vmatpush.msra.mxu0 0.0
      %357 = vmatpush.msra.mxu0 0.0
      %358 = vmatpush.msra.mxu0 0.0
      %359 = vmatpush.msra.mxu0 %v342
      %360 = vmatmul.f32.gmra.mxu0 %v338
      %v361 = vpop.f32.mrf.mxu0
      %v362 = vadd.f32 %v336, %v361
      %363 = vdwg.mxu0
      %v364 = vxor.u32 %v362, 2147483648
      %v365 = vmul.f32 %v364, 1.442695
      %v366 = vpow.pop %v365
      %v367 = vadd.f32 %v366, 1.0
      %v368 = vrcp.pop %v367
      %v369 = vmul.f32 %v367, %v368
      %v370 = vsub.f32 1.0, %v369
      %v371 = vmul.f32 %v368, %v370
      %v372 = vadd.f32 %v368, %v371
      %vm373 = vweird.f32 %v367
      %vm374 = vweird.f32 %v368
      %vm375 = vmor %vm373, %vm374
      %v376 = vsel %vm375, %v368, %v372
      %v377 = vand.u32 2147483647, %v367
      %vm378 = vcmp.eq.f32.partialorder %v377, 8.507059e+37
      %v379 = vand.u32 %v367, 2147483648
      %v380 = vor.u32 1.1754944e-38, %v379
      %v381 = vsel %vm378, %v380, %v376
      %v382 = vmul.f32 1.0, %v381
      %v383 = vmul.f32 %v362, %v382
      %v384 = vld [vmem:[%s3] sm:$0x3]
      %v385 = vld [vmem:[%s4] sm:$0x1]
      %vm386 = vcmask 15360
      %v388 = vsel %vm386, %v383, 0
      %vm390 = vcmask 1041408
      %v392 = vsel %vm390, %v384, 0
      %394 = vmatpush.msra.mxu0 0.0
      %395 = vmatpush.msra.mxu0 0.0
      %396 = vmatpush.msra.mxu0 0.0
      %397 = vmatpush.msra.mxu0 0.0
      %398 = vmatpush.msra.mxu0 0.0
      %399 = vmatpush.msra.mxu0 0.0
      %400 = vmatpush.msra.mxu0 0.0
      %401 = vmatpush.msra.mxu0 0.0
      %402 = vmatpush.msra.mxu0 0.0
      %403 = vmatpush.msra.mxu0 0.0
      %404 = vmatpush.msra.mxu0 0.0
      %405 = vmatpush.msra.mxu0 0.0
      %406 = vmatpush.msra.mxu0 0.0
      %407 = vmatpush.msra.mxu0 0.0
      %408 = vmatpush.msra.mxu0 0.0
      %409 = vmatpush.msra.mxu0 %v392
      %410 = vmatmul.f32.gmra.mxu0 %v388
      %v411 = vpop.f32.mrf.mxu0
      %v412 = vadd.f32 %v385, %v411
      %413 = vdwg.mxu0
      %v414 = vxor.u32 %v412, 2147483648
      %v415 = vmul.f32 %v414, 1.442695
      %v416 = vpow.pop %v415
      %v417 = vadd.f32 %v416, 1.0
      %v418 = vrcp.pop %v417
      %v419 = vmul.f32 %v417, %v418
      %v420 = vsub.f32 1.0, %v419
      %v421 = vmul.f32 %v418, %v420
      %v422 = vadd.f32 %v418, %v421
      %vm423 = vweird.f32 %v417
      %vm424 = vweird.f32 %v418
      %vm425 = vmor %vm423, %vm424
      %v426 = vsel %vm425, %v418, %v422
      %v427 = vand.u32 2147483647, %v417
      %vm428 = vcmp.eq.f32.partialorder %v427, 8.507059e+37
      %v429 = vand.u32 %v417, 2147483648
      %v430 = vor.u32 1.1754944e-38, %v429
      %v431 = vsel %vm428, %v430, %v426
      %v432 = vmul.f32 1.0, %v431
      %v433 = vperm.slane %v432, 0
      %v434 = vmul.f32 %v225, %v433
      %v435 = vmul.f32 %v226, %v433
      %v436 = vmul.f32 %v227, %v433
      %v437 = vmul.f32 %v228, %v433
      %v438 = vmul.f32 %v229, %v433
      %v439 = vmul.f32 %v230, %v433
      %v440 = vmul.f32 %v231, %v433
      %v441 = vmul.f32 %v232, %v433
      %v442 = vmul.f32 %v233, %v433
      %v443 = vmul.f32 %v234, %v433
      %v444 = vmul.f32 %v235, %v433
      %v445 = vmul.f32 %v236, %v433
      %v446 = vmul.f32 %v237, %v433
      %v447 = vmul.f32 %v238, %v433
      %v448 = vmul.f32 %v239, %v433
      %v449 = vmul.f32 %v240, %v433
      %v450 = vmul.f32 %v241, %v433
      %v451 = vmul.f32 %v242, %v433
      %v452 = vmul.f32 %v243, %v433
      %v453 = vmul.f32 %v244, %v433
      %v454 = vmul.f32 %v245, %v433
      %v455 = vmul.f32 %v246, %v433
      %v456 = vmul.f32 %v247, %v433
      %v457 = vmul.f32 %v248, %v433
      %v458 = vmul.f32 %v249, %v433
      %v459 = vmul.f32 %v250, %v433
      %v460 = vmul.f32 %v251, %v433
      %v461 = vmul.f32 %v252, %v433
      %v462 = vmul.f32 %v253, %v433
      %v463 = vmul.f32 %v254, %v433
      %v464 = vmul.f32 %v255, %v433
      %v465 = vmul.f32 %v256, %v433
      %466 = vst.msk [vmem:[%s224] sm:$0xff] %vm257, %v434
      %467 = vst.msk [vmem:[%s224 + $0x8] sm:$0xff] %vm257, %v435
      %468 = vst.msk [vmem:[%s224 + $0x10] sm:$0xff] %vm257, %v436
      %469 = vst.msk [vmem:[%s224 + $0x18] sm:$0xff] %vm257, %v437
      %470 = vst.msk [vmem:[%s224 + $0x20] sm:$0xff] %vm257, %v438
      %471 = vst.msk [vmem:[%s224 + $0x28] sm:$0xff] %vm257, %v439
      %472 = vst.msk [vmem:[%s224 + $0x30] sm:$0xff] %vm257, %v440
      %473 = vst.msk [vmem:[%s224 + $0x38] sm:$0xff] %vm257, %v441
      %474 = vst.msk [vmem:[%s224 + $0x40] sm:$0xff] %vm257, %v442
      %475 = vst.msk [vmem:[%s224 + $0x48] sm:$0xff] %vm257, %v443
      %476 = vst.msk [vmem:[%s224 + $0x50] sm:$0xff] %vm257, %v444
      %477 = vst.msk [vmem:[%s224 + $0x58] sm:$0xff] %vm257, %v445
      %478 = vst.msk [vmem:[%s224 + $0x60] sm:$0xff] %vm257, %v446
      %479 = vst.msk [vmem:[%s224 + $0x68] sm:$0xff] %vm257, %v447
      %480 = vst.msk [vmem:[%s224 + $0x70] sm:$0xff] %vm257, %v448
      %481 = vst.msk [vmem:[%s224 + $0x78] sm:$0xff] %vm257, %v449
      %482 = vst.msk [vmem:[%s224 + $0x80] sm:$0xff] %vm257, %v450
      %483 = vst.msk [vmem:[%s224 + $0x88] sm:$0xff] %vm257, %v451
      %484 = vst.msk [vmem:[%s224 + $0x90] sm:$0xff] %vm257, %v452
      %485 = vst.msk [vmem:[%s224 + $0x98] sm:$0xff] %vm257, %v453
      %486 = vst.msk [vmem:[%s224 + $0xa0] sm:$0xff] %vm257, %v454
      %487 = vst.msk [vmem:[%s224 + $0xa8] sm:$0xff] %vm257, %v455
      %488 = vst.msk [vmem:[%s224 + $0xb0] sm:$0xff] %vm257, %v456
      %489 = vst.msk [vmem:[%s224 + $0xb8] sm:$0xff] %vm257, %v457
      %490 = vst.msk [vmem:[%s224 + $0xc0] sm:$0xff] %vm257, %v458
      %491 = vst.msk [vmem:[%s224 + $0xc8] sm:$0xff] %vm257, %v459
      %492 = vst.msk [vmem:[%s224 + $0xd0] sm:$0xff] %vm257, %v460
      %493 = vst.msk [vmem:[%s224 + $0xd8] sm:$0xff] %vm257, %v461
      %494 = vst.msk [vmem:[%s224 + $0xe0] sm:$0xff] %vm257, %v462
      %495 = vst.msk [vmem:[%s224 + $0xe8] sm:$0xff] %vm257, %v463
      %496 = vst.msk [vmem:[%s224 + $0xf0] sm:$0xff] %vm257, %v464
      %497 = vst.msk [vmem:[%s224 + $0xf8] sm:$0xff] %vm257, %v465
      %p498 = scmp.lt.s32.totalorder %s16, 1
      %s499 = scalar_select %p498, %s16, 1
      %s500 = smul.addr %s499, 32
      %s501 = smul.addr %s500, 8
      %s502 = scalar_lea.vmem %s5, %s501
      // Predicated region
      $region41: #{tpu_custom_call.1} parent=39 // pred_check
        %p503 = pneg %p144
      $region42: #{tpu_custom_call.1} parent=39 // pred_check_branch
        %505 = sbr.rel (%p503) target = $region44
      $region43: #{tpu_custom_call.1} parent=39 // pred_region
        _
      $region44: #{tpu_custom_call.1} parent=39 // pred_fallthru
        _
    $region40: #{tpu_custom_call.1} parent=5 // pred_fallthru
      _
    %p506 = scmp.le.s32.totalorder 2, %s11
    // Predicated region
    $region45: #{tpu_custom_call.1} parent=5 // pred_check
      %p507 = pneg %p506
    $region46: #{tpu_custom_call.1} parent=5 // pred_check_branch
      %509 = sbr.rel (%p507) target = $region48
    $region47: #{tpu_custom_call.1} parent=5 // pred_region
      %s510 = ssub.s32 %s11, 2
      // Predicated region
      $region49: #{tpu_custom_call.1} parent=47 // pred_check
        %p511 = pneg %p150
      $region50: #{tpu_custom_call.1} parent=47 // pred_check_branch
        %513 = sbr.rel (%p511) target = $region52
      $region51: #{tpu_custom_call.1} parent=47 // pred_region
        %p514 = scmp.lt.s32.totalorder %s17, 1
        %s515 = scalar_select %p514, %s17, 1
        %s516 = smul.addr %s515, 32
        %s517 = smul.addr %s516, 8
        %s518 = scalar_lea.vmem %s5, %s517
      $region52: #{tpu_custom_call.1} parent=47 // pred_fallthru
        _
    $region48: #{tpu_custom_call.1} parent=5 // pred_fallthru
      _
  $region6: #{tpu_custom_call.1} parent=0 // loop_footer
    %s15 = sadd.s32 1, %s11
  $region7: #{tpu_custom_call.1} parent=0 // loop_footer_branch
    %10 = sbr.rel target = $region3
  $region8: #{tpu_custom_call.1} parent=0 // loop_exit
    _

</llo_original>
